<compile_context>
chip_gen: v7x
topology: tpu7x:2x2x1
jax: 0.10.0
libtpu: 0.0.40
codegen_flags: <defaults>
</compile_context>

<pallas_src>
import functools

import jax
import jax.numpy as jnp
from jax.experimental import pallas as pl
from jax.experimental.pallas import tpu as pltpu

_NEG_PAD = -1e9  # class-dim pad value (bf16/f32 representable; exp(pad - max) == 0)


def _ce_partial_kernel(pred_ref, label_ref, loss_ref, *, n_rows, tile_rows):
    """loss_ref[0,0,0] = sum over valid rows r of (logsumexp(logits[r]) - logits[r, label[r]])."""
    x = pred_ref[...]                                   # (TM, Cp), native dtype (bf16 stays bf16)
    labels = label_ref[...]                             # (TM, 1) int32

    # Row max in the native dtype: exact (comparisons don't round), halves vreg
    # traffic for bf16 on v6e/v7x; Mosaic upcasts automatically on v5e.
    m = jnp.max(x, axis=-1, keepdims=True).astype(jnp.float32)          # (TM, 1)

    # Numerically stable log-sum-exp in f32.
    shifted = x.astype(jnp.float32) - m                                  # (TM, Cp)
    lse = jnp.log(jnp.sum(jnp.exp(shifted), axis=-1, keepdims=True))     # (TM, 1)

    # Target-class (shifted) logit via masked select+sum (no one-hot matmul).
    col_ids = jax.lax.broadcasted_iota(jnp.int32, shifted.shape, 1)      # (TM, Cp)
    target = jnp.sum(jnp.where(col_ids == labels, shifted, 0.0),
                     axis=-1, keepdims=True)                             # (TM, 1)

    # Mask padded rows of the ragged last tile so garbage/NaN rows contribute 0.
    row_ids = (jax.lax.broadcasted_iota(jnp.int32, (tile_rows, 1), 0)
               + pl.program_id(0) * tile_rows)                           # (TM, 1)
    per_row = jnp.where(row_ids < n_rows, lse - target, 0.0)             # (TM, 1)

    # One f32 partial sum per tile.
    loss_ref[0] = jnp.sum(per_row, axis=0, keepdims=True)                # (1, 1)


def _vmem_limit_bytes() -> int:
    """Generation-aware scoped-VMEM limit: 64 MiB on 128 MiB chips (v5e/v6e), 32 MiB on v7x."""
    try:
        cap = int(pltpu.get_tpu_info().vmem_capacity_bytes)
    except Exception:  # no TPU info available at trace time -> conservative default
        cap = 64 * 1024 * 1024
    return min(64 * 1024 * 1024, cap // 2)


def _choose_tile_rows(n: int, c_pad: int, itemsize: int, vmem_limit: int) -> int:
    """Pick the largest sublane-aligned row tile whose live VMEM fits the limit."""
    # Live bytes per tile row: double-buffered native-dtype input tile plus ~3x f32
    # working arrays (cast logits / shifted / exp) materialized by the reductions.
    per_row_bytes = 2 * c_pad * itemsize + 3 * c_pad * 4
    usable = (vmem_limit * 3) // 4                      # headroom for labels/partials/overheads
    tm = max(8, (usable // per_row_bytes) // 8 * 8)     # sublane-aligned, budget-driven (no 1024 cap)
    if tm >= n:
        if n >= 16:
            # Whole problem fits in one tile: split into >= 2 grid steps so both
            # v7x TensorCores get work under dimension_semantics=("parallel",).
            tm = max(8, ((pl.cdiv(n, 2) + 7) // 8) * 8)
        else:
            tm = n                                      # tiny case: single full-dim tile is legal
    return min(tm, n)


def classification_loss(pred: jax.Array, label: jax.Array, *, tile_rows: int | None = None) -> jax.Array:
    """Equivalent of ClassificationLoss(num_class).forward(pred, label):
    nn.CrossEntropyLoss() (reduction='mean') over (N, C) logits."""
    n, c = pred.shape
    label2d = label.reshape(n, 1).astype(jnp.int32)

    # Pad the class dim to a lane-dense multiple of 128 with a large negative value.
    c_pad = max(128, ((c + 127) // 128) * 128)
    if c_pad != c:
        pred = jnp.pad(pred, ((0, 0), (0, c_pad - c)), constant_values=_NEG_PAD)

    vmem_limit = _vmem_limit_bytes()
    if tile_rows is None:
        tm = _choose_tile_rows(n, c_pad, pred.dtype.itemsize, vmem_limit)
    else:
        tm = min(tile_rows, n)
        if tm < n:
            tm = max(8, (tm // 8) * 8)

    num_tiles = pl.cdiv(n, tm)

    partials = pl.pallas_call(
        functools.partial(_ce_partial_kernel, n_rows=n, tile_rows=tm),
        out_shape=jax.ShapeDtypeStruct((num_tiles, 1, 1), jnp.float32),
        grid=(num_tiles,),
        in_specs=[
            pl.BlockSpec((tm, c_pad), lambda i: (i, 0)),   # logits tile, native dtype on the wire
            pl.BlockSpec((tm, 1), lambda i: (i, 0)),       # labels tile
        ],
        # One scalar per tile; leading grid-mapped dim of size 1, last two dims full.
        out_specs=pl.BlockSpec((1, 1, 1), lambda i: (i, 0, 0)),
        compiler_params=pltpu.CompilerParams(
            # Row tiles are independent (distinct output blocks) -> shard across v7x TCs.
            dimension_semantics=("parallel",),
            vmem_limit_bytes=vmem_limit,
        ),
        cost_estimate=pl.CostEstimate(
            flops=6 * n * c_pad,
            transcendentals=n * c_pad,
            bytes_accessed=n * c_pad * pred.dtype.itemsize + n * 4 + num_tiles * 4,
        ),
    )(pred, label2d)

    # Tiny final mean over num_tiles partial sums (keeps the grid axis parallel).
    return jnp.sum(partials) / jnp.float32(n)


if __name__ == "__main__":
    def ref_loss(p, l):
        logp = jax.nn.log_softmax(p.astype(jnp.float32), axis=-1)
        return jnp.mean(-jnp.take_along_axis(logp, l[:, None].astype(jnp.int32), axis=-1)[:, 0])

    # Small case matching the module defaults (single-tile path, C padded 32 -> 128).
    num_classes = 32
    batch = 8
    key = jax.random.PRNGKey(0)
    k_pred, k_label = jax.random.split(key)
    pred = jax.random.normal(k_pred, (batch, num_classes), dtype=jnp.float32)
    label = jax.random.randint(k_label, (batch,), 0, num_classes, dtype=jnp.int32)

    loss = classification_loss(pred, label)
    jax.block_until_ready(loss)
    assert jnp.allclose(loss, ref_loss(pred, label), atol=1e-5, rtol=1e-5), (
        loss, ref_loss(pred, label))

    # Tiled / pipelined path: multi-step grid, ragged (masked) last tile, bf16 input,
    # C padded 160 -> 256.
    batch2, classes2 = 20, 160
    k2p, k2l = jax.random.split(jax.random.PRNGKey(0))
    pred2 = jax.random.normal(k2p, (batch2, classes2), dtype=jnp.float32).astype(jnp.bfloat16)
    label2 = jax.random.randint(k2l, (batch2,), 0, classes2, dtype=jnp.int32)

    loss2 = classification_loss(pred2, label2, tile_rows=8)   # grid = (3,), last tile partial
    jax.block_until_ready(loss2)
    assert jnp.allclose(loss2, ref_loss(pred2, label2), atol=2e-3, rtol=2e-3), (
        loss2, ref_loss(pred2, label2))

    # Auto-tiling path on the same data (exercises grid >= 2 splitting for N >= 16).
    loss3 = classification_loss(pred2, label2)
    jax.block_until_ready(loss3)
    assert jnp.allclose(loss3, ref_loss(pred2, label2), atol=2e-3, rtol=2e-3), (
        loss3, ref_loss(pred2, label2))

    print("KERNEL_OK")
</pallas_src>

<mosaic_0001>
module attributes {stable_mosaic.version = 11 : i64} {
  func.func @_ce_partial_kernel(%arg0: i32, %arg1: memref<8x128xf32, #tpu.memory_space<vmem>>, %arg2: memref<8x1xi32, #tpu.memory_space<vmem>>, %arg3: memref<1x1x1xf32, #tpu.memory_space<vmem>>) attributes {dimension_semantics = [#tpu.dimension_semantics<parallel>], iteration_bounds = array<i64: 1>, scalar_prefetch = 0 : i64, scratch_operands = 0 : i64, tpu.core_type = #tpu.core_type<tc>, window_params = [{transform_indices = @transform_0, window_bounds = array<i64: 8, 128>}, {transform_indices = @transform_1, window_bounds = array<i64: 8, 1>}, {transform_indices = @transform_2, window_bounds = array<i64: 1, 1, 1>}]} {
    %c0 = arith.constant 0 : index
    %c0_0 = arith.constant 0 : index
    %0 = vector.load %arg1[%c0, %c0_0] : memref<8x128xf32, #tpu.memory_space<vmem>>, vector<8x128xf32>
    %c0_1 = arith.constant 0 : index
    %c0_2 = arith.constant 0 : index
    %1 = vector.load %arg2[%c0_1, %c0_2] : memref<8x1xi32, #tpu.memory_space<vmem>>, vector<8x1xi32>
    %cst = arith.constant dense<0xFF800000> : vector<8xf32>
    %2 = vector.multi_reduction <maximumf>, %0, %cst [1] : vector<8x128xf32> to vector<8xf32>
    %3 = vector.shape_cast %2 : vector<8xf32> to vector<8x1xf32>
    %4 = vector.broadcast %3 : vector<8x1xf32> to vector<8x128xf32>
    %5 = arith.subf %0, %4 : vector<8x128xf32>
    %6 = math.exp %5 : vector<8x128xf32>
    %cst_3 = arith.constant dense<0.000000e+00> : vector<8xf32>
    %7 = vector.multi_reduction <add>, %6, %cst_3 [1] : vector<8x128xf32> to vector<8xf32>
    %8 = vector.shape_cast %7 : vector<8xf32> to vector<8x1xf32>
    %9 = math.log %8 : vector<8x1xf32>
    %10 = tpu.iota {dimensions = array<i32: 1>} : vector<8x128xi32>
    %11 = vector.broadcast %1 : vector<8x1xi32> to vector<8x128xi32>
    %12 = arith.cmpi eq, %10, %11 : vector<8x128xi32>
    %cst_4 = arith.constant 0.000000e+00 : f32
    %13 = vector.broadcast %cst_4 : f32 to vector<8x128xf32>
    %14 = arith.select %12, %5, %13 : vector<8x128xi1>, vector<8x128xf32>
    %cst_5 = arith.constant dense<0.000000e+00> : vector<8xf32>
    %15 = vector.multi_reduction <add>, %14, %cst_5 [1] : vector<8x128xf32> to vector<8xf32>
    %16 = vector.shape_cast %15 : vector<8xf32> to vector<8x1xf32>
    %17 = tpu.iota {dimensions = array<i32: 0>} : vector<8x1xi32>
    %c8_i32 = arith.constant 8 : i32
    %18 = arith.muli %arg0, %c8_i32 : i32
    %19 = vector.broadcast %18 : i32 to vector<8x1xi32>
    %20 = arith.addi %17, %19 : vector<8x1xi32>
    %c8_i32_6 = arith.constant 8 : i32
    %21 = vector.broadcast %c8_i32_6 : i32 to vector<8x1xi32>
    %22 = arith.cmpi slt, %20, %21 : vector<8x1xi32>
    %23 = arith.subf %9, %16 : vector<8x1xf32>
    %cst_7 = arith.constant 0.000000e+00 : f32
    %24 = vector.broadcast %cst_7 : f32 to vector<8x1xf32>
    %25 = arith.select %22, %23, %24 : vector<8x1xi1>, vector<8x1xf32>
    %cst_8 = arith.constant dense<0.000000e+00> : vector<1xf32>
    %26 = vector.multi_reduction <add>, %25, %cst_8 [0] : vector<8x1xf32> to vector<1xf32>
    %27 = vector.shape_cast %26 : vector<1xf32> to vector<1x1xf32>
    %c0_9 = arith.constant 0 : index
    %c0_10 = arith.constant 0 : index
    %c0_11 = arith.constant 0 : index
    %28 = vector.load %arg3[%c0_9, %c0_10, %c0_11] : memref<1x1x1xf32, #tpu.memory_space<vmem>>, vector<1x1x1xf32>
    %29 = vector.shape_cast %28 : vector<1x1x1xf32> to vector<1x1xf32>
    %30 = vector.shape_cast %27 : vector<1x1xf32> to vector<1x1x1xf32>
    tpu.vector_store %arg3[%c0_9, %c0_10, %c0_11], %30 {strides = array<i32>} : memref<1x1x1xf32, #tpu.memory_space<vmem>>, vector<1x1x1xf32>,
    return
  }
  func.func @transform_0(%arg0: i32) -> (i32, i32) {
    %c0_i32 = arith.constant 0 : i32
    %c0_i32_0 = arith.constant 0 : i32
    return %arg0, %c0_i32 : i32, i32
  }
  func.func @transform_1(%arg0: i32) -> (i32, i32) {
    %c0_i32 = arith.constant 0 : i32
    %c0_i32_0 = arith.constant 0 : i32
    return %arg0, %c0_i32 : i32, i32
  }
  func.func @transform_2(%arg0: i32) -> (i32, i32, i32) {
    %c0_i32 = arith.constant 0 : i32
    %c0_i32_0 = arith.constant 0 : i32
    %c0_i32_1 = arith.constant 0 : i32
    return %arg0, %c0_i32, %c0_i32_0 : i32, i32, i32
  }
}

</mosaic_0001>

<llo_original>
// kernel: tpu_custom_call.1
$region0: #{tpu_custom_call.1}
  #allocation0 [shape = 'u32[]', space=smem, size = 0x4, offset = 0x4, fixed_abs, tag = 'smem constant byte address 0x4 - core index']
  #allocation1 [shape = 'u32[144,128]{1,0:T(1,128)}', space=vmem, size = 0x12000, scoped, tag = 'internal scratch']
  %s0 = inlined_call_operand.vmem [shape: f32[8,128], index: 0, kind: input, shape index: {}]
  %s1 = inlined_call_operand.vmem [shape: s32[8,1], index: 1, kind: input, shape index: {}]
  %s2 = inlined_call_operand.hbm [shape: f32[1,1,1], index: 2, kind: output, shape index: {}]
  %s3 = sld [smem:[#allocation0]]
  $region18: #{tpu_custom_call.1} parent=0
    _
  %s5 = ssub.s32 1, %s3
  %s6 = scalar_select 0, %s5, %s3
  $region1: #{tpu_custom_call.1} parent=0
    #allocation2 [shape = 'u8[512]{0}', space=vmem, size = 0x400, scoped, tag = 'output window, operand 0, single buffered']
    #allocation3 [shape = 's32[1]{0}', space=sflag, size = 0x4, scoped, tag = 'scoped memory for tpu_custom_call.1']
    %7 = vsyncpa [#allocation3], 0
    // Predicated region
    $region2: #{tpu_custom_call.1} parent=1 // pred_check
      _
    $region3: #{tpu_custom_call.1} parent=1 // pred_check_branch
      %9 = sbr.rel (0) target = $region5
    $region4: #{tpu_custom_call.1} parent=1 // pred_region
      _
    $region5: #{tpu_custom_call.1} parent=1 // pred_fallthru
      _
    // Predicated region
    $region6: #{tpu_custom_call.1} parent=1 // pred_check
      _
    $region7: #{tpu_custom_call.1} parent=1 // pred_check_branch
      %11 = sbr.rel (0) target = $region9
    $region8: #{tpu_custom_call.1} parent=1 // pred_region
      _
    $region9: #{tpu_custom_call.1} parent=1 // pred_fallthru
      _
    %v12 = vld [vmem:[%s0] sm:$0xff]
    %v13 = vld [vmem:[%s1] sm:$0xff]
    %14 = vmax.xlane.f32.xlu0 %v12
    %v15 = vpop.xlane.xlu0 %14
    %v16 = vsub.f32 %v12, %v15
    %v17 = vmul.f32 %v16, 1.442695
    %v18 = vpow.pop %v17
    %19 = vadd.xlane.f32.xlu0 %v18
    %v20 = vpop.xlane.xlu0 %19
    %v21 = vlog2.pop %v20
    %v22 = vmul.f32 %v21, 0.6931472
    %v23 = vlaneseq
    %v24 = vand.u32 %v23, 127
    %25 = vset.pattern.permute.xlu0 0
    %26 = vperm.xlu0 %25, %v13
    %v27 = vpop.permute.xlu0 %26
    %vm28 = vcmp.eq.s32.totalorder %v24, %v27
    %v29 = vsel %vm28, %v16, 0.0
    %30 = vadd.xlane.f32.xlu0 %v29
    %v31 = vpop.xlane.xlu0 %30
    %v32 = vlaneseq
    %v33 = vshrl.u32 %v32, 7
    %s34 = smul.u32 0, 8
    %v35 = vstv %s34
    %v36 = vadd.s32 %v33, %v35
    %vm37 = vcmp.lt.s32.totalorder %v36, 8
    %v38 = vsub.f32 %v22, %v31
    %v39 = vsel %vm37, %v38, 0.0
    %v40 = vrot.slane %v39, 4
    %v41 = vadd.f32 %v39, %v40
    %v42 = vrot.slane %v41, 2
    %v43 = vadd.f32 %v41, %v42
    %v44 = vrot.slane %v43, 1
    %v45 = vadd.f32 %v43, %v44
    %vm46 = vcmask 0
    %47 = vst.msk [vmem:[#allocation2] sm:$0x1] %vm46, %v45
    // Predicated region
    $region10: #{tpu_custom_call.1} parent=1 // pred_check
      _
    $region11: #{tpu_custom_call.1} parent=1 // pred_check_branch
      %49 = sbr.rel (0) target = $region13
    $region12: #{tpu_custom_call.1} parent=1 // pred_region
      %s51 = ssub.s32 16, 16
      %52 = vsyncadd [#allocation3], %s51
      %s54 = sshll.u32 [#allocation2], 4
      %s55 = int_to_ptr.vmem [resolvable:$true] %s54
      %57 = dma.vmem_to_hbm [thread:$0]  %s55, 16, %s2, [#allocation3]
    $region13: #{tpu_custom_call.1} parent=1 // pred_fallthru
      _
    // Predicated region
    $region14: #{tpu_custom_call.1} parent=1 // pred_check
      _
    $region15: #{tpu_custom_call.1} parent=1 // pred_check_branch
      %59 = sbr.rel (0) target = $region17
    $region16: #{tpu_custom_call.1} parent=1 // pred_region
      %60 = dma.done [#allocation3], 16
    $region17: #{tpu_custom_call.1} parent=1 // pred_fallthru
      _
    %61 = vsyncpa [#allocation3], 1

</llo_original>
